<compile_context>
chip_gen: v7x
topology: tpu7x:2x2x1
jax: 0.10.0
libtpu: 0.0.40
codegen_flags: <defaults>
</compile_context>

<pallas_src>
import functools

import jax
import jax.numpy as jnp
from jax import lax
from jax.experimental import pallas as pl
from jax.experimental.pallas import tpu as pltpu


def _axis_slice(ndim, axis, sl):
    idx = [slice(None)] * ndim
    idx[axis] = sl
    return tuple(idx)


def _dn_kernel(x_ref, o_ref, s_ref, t_ref, *, b_type, b_size, sigma,
               h_axis, w_axis, c_axis):
    """x_ref/o_ref: (Nb, C, H, W) or (Nb, H, W, C) blocks (axes via *_axis).
    s_ref: f32 scratch padded by 2*(kw//2) along w_axis (horizontal pass).
    t_ref: f32 scratch padded by 2*(kh//2) along h_axis (vertical pass)."""
    kh, kw = b_size
    ph, pw = kh // 2, kw // 2
    nd = len(x_ref.shape)
    H = x_ref.shape[h_axis]
    W = x_ref.shape[w_axis]

    x = x_ref[...].astype(jnp.float32)
    if b_type == "linf":
        a, combine = jnp.abs(x), jnp.maximum
    elif b_type == "l1":
        a, combine = jnp.abs(x), jnp.add
    elif b_type == "l2":
        a, combine = x * x, jnp.add
    else:
        raise NotImplementedError(b_type)

    # ---- horizontal window pass: kw shifted ref-reads of the W-padded scratch.
    # Zero padding is exact for l1/l2 (conv zero-pads) and neutral for linf
    # (|x| >= 0 and every window contains its own center pixel).
    h_acc = a                                   # the dw == pw (center) term
    if pw > 0:
        Wp = W + 2 * pw
        zs = list(s_ref.shape)
        zs[w_axis] = pw
        z = jnp.zeros(zs, jnp.float32)
        s_ref[_axis_slice(nd, w_axis, slice(0, pw))] = z
        s_ref[_axis_slice(nd, w_axis, slice(Wp - pw, Wp))] = z
        s_ref[_axis_slice(nd, w_axis, slice(pw, pw + W))] = a
        for dw in range(kw):
            if dw != pw:
                h_acc = combine(h_acc, s_ref[_axis_slice(nd, w_axis, pl.ds(dw, W))])

    # ---- vertical window pass: kh shifted ref-reads of the H-padded scratch.
    supp = h_acc                                # the dh == ph (center) term
    if ph > 0:
        Hp = H + 2 * ph
        zs = list(t_ref.shape)
        zs[h_axis] = ph
        z = jnp.zeros(zs, jnp.float32)
        t_ref[_axis_slice(nd, h_axis, slice(0, ph))] = z
        t_ref[_axis_slice(nd, h_axis, slice(Hp - ph, Hp))] = z
        t_ref[_axis_slice(nd, h_axis, slice(ph, ph + H))] = h_acc
        for dh in range(kh):
            if dh != ph:
                supp = combine(supp, t_ref[_axis_slice(nd, h_axis, pl.ds(dh, H))])

    if b_type == "l2":
        supp = jnp.sqrt(supp)

    # Per-image channel mean, then per-image global spatial max.
    # TODO(synk): for C >= 256 in the channels-last layout this mean could be a
    # (H*W, C) x (C, 1) ones-vector matmul on the otherwise idle MXU.
    sf = jnp.mean(supp, axis=c_axis, keepdims=True)
    m = jnp.max(jnp.max(sf, axis=w_axis, keepdims=True), axis=h_axis, keepdims=True)

    if sigma == 1.0:
        inv = 1.0 / (m + 1e-07)                 # per-image scalar divisor
    else:
        d = sigma * m + (1.0 - sigma) * sf + 1e-07
        r = pl.reciprocal(d, approx=True)       # EUP slot, frees VALU
        r = r * (2.0 - d * r)                   # two Newton steps -> f32 accuracy
        r = r * (2.0 - d * r)
        inv = r

    o_ref[...] = (x_ref[...].astype(jnp.float32) * inv).astype(o_ref.dtype)


def _phys_f32_bytes(shape):
    """Physical (8,128)-tiled VMEM footprint of an f32 slab of `shape`."""
    *majors, m2, m1 = shape
    n = 1
    for d in majors:
        n *= d
    return 4 * n * (pl.cdiv(m2, 8) * 8) * (pl.cdiv(m1, 128) * 128)


def divisive_normalization_2d(x, b_type="linf", b_size=(3, 3), sigma=1.0, alpha=0.0):
    """Pallas TPU implementation of DivisiveNormalization2d.forward (NCHW in/out)."""
    del alpha  # unused in the PyTorch forward pass as well
    if isinstance(b_size, int):
        b_size = (b_size, b_size)
    kh, kw = b_size
    if kh % 2 == 0 or kw % 2 == 0:
        raise NotImplementedError(
            "Odd b_size only: PyTorch changes the output size for even kernels.")
    ph, pw = kh // 2, kw // 2
    N, C, H, W = x.shape

    # Layout selection: keep the last (lane) dim dense.  With small W every
    # vld/vst runs at W/128 lane utilization, so when C is lane-sized we run
    # channels-last and the window shifts move to sublane / batch axes.
    use_cl = (W < 128) and (C >= 128) and (C >= W)
    if use_cl:
        xk = jnp.transpose(x, (0, 2, 3, 1))             # (N, H, W, C)
        h_axis, w_axis, c_axis = 1, 2, 3
        img_block = (1, H, W, C)
    else:
        xk = x                                          # (N, C, H, W)
        h_axis, w_axis, c_axis = 2, 3, 1
        img_block = (1, C, H, W)

    # ---- physical (tiled) VMEM footprint per image -> images per step (nb) ----
    s_img = list(img_block); s_img[w_axis] += 2 * pw
    t_img = list(img_block); t_img[h_axis] += 2 * ph
    per_img = (_phys_f32_bytes(tuple(s_img)) + _phys_f32_bytes(tuple(t_img))
               + 7 * _phys_f32_bytes(img_block))        # dbl-buf in/out + live temps
    try:
        phys_vmem = int(pltpu.get_tpu_info().vmem_capacity_bytes)
    except Exception:
        phys_vmem = 64 * 1024 * 1024                    # v7x per-core VMEM (smallest)
    vmem_limit = min(int(0.75 * phys_vmem), 96 * 1024 * 1024)
    budget = int(0.75 * vmem_limit)

    # Keep >= ~4 grid steps (>= 2 for tiny N) so the auto-pipeline can hide DMA
    # and both v7x TensorCores get work; otherwise fill the VMEM budget.
    min_steps = max(1, min(N, 4))
    nb = max(1, min(budget // max(per_img, 1), pl.cdiv(N, min_steps)))
    grid = (pl.cdiv(N, nb),)                            # partial tail block is fine
    vmem_limit = min(int(0.9 * phys_vmem),
                     max(vmem_limit, nb * per_img + (8 << 20)))

    block = (nb,) + img_block[1:]
    s_shape = list(block); s_shape[w_axis] += 2 * pw
    t_shape = list(block); t_shape[h_axis] += 2 * ph

    kernel = functools.partial(
        _dn_kernel, b_type=b_type, b_size=(kh, kw), sigma=float(sigma),
        h_axis=h_axis, w_axis=w_axis, c_axis=c_axis)

    idx = lambda n: (n, 0, 0, 0)
    out = pl.pallas_call(
        kernel,
        out_shape=jax.ShapeDtypeStruct(xk.shape, x.dtype),
        grid=grid,
        in_specs=[pl.BlockSpec(block, idx)],
        out_specs=pl.BlockSpec(block, idx),
        scratch_shapes=[pltpu.VMEM(tuple(s_shape), jnp.float32),
                        pltpu.VMEM(tuple(t_shape), jnp.float32)],
        compiler_params=pltpu.CompilerParams(
            dimension_semantics=("parallel",),
            vmem_limit_bytes=vmem_limit,
        ),
    )(xk)

    if use_cl:
        out = jnp.transpose(out, (0, 3, 1, 2))
    return out


def _reference(x, b_type, b_size, sigma):
    """Independent pure-JAX reference mirroring the PyTorch forward."""
    kh, kw = b_size
    ph, pw = kh // 2, kw // 2
    pads = [(0, 0), (0, 0), (ph, ph), (pw, pw)]
    if b_type == "linf":
        supp = lax.reduce_window(
            jnp.abs(x), -jnp.inf, lax.max, (1, 1, kh, kw), (1, 1, 1, 1), pads)
    elif b_type == "l1":
        supp = lax.reduce_window(
            jnp.abs(x), 0.0, lax.add, (1, 1, kh, kw), (1, 1, 1, 1), pads)
    elif b_type == "l2":
        supp = jnp.sqrt(lax.reduce_window(
            x * x, 0.0, lax.add, (1, 1, kh, kw), (1, 1, 1, 1), pads))
    else:
        raise NotImplementedError(b_type)
    sf = jnp.mean(supp, axis=1, keepdims=True)
    div = sigma * jnp.max(sf, axis=(2, 3), keepdims=True) + (1 - sigma) * sf + 1e-07
    return x / div


if __name__ == "__main__":
    key = jax.random.PRNGKey(0)
    x = jax.random.normal(key, (2, 4, 16, 16), dtype=jnp.float32)

    configs = [
        dict(b_type="linf", b_size=(3, 3), sigma=1.0),   # module defaults
        dict(b_type="l1",   b_size=(3, 3), sigma=0.5),
        dict(b_type="l2",   b_size=(5, 5), sigma=0.25),
    ]
    for cfg in configs:
        out = jax.block_until_ready(divisive_normalization_2d(x, **cfg))
        ref = _reference(x, cfg["b_type"], cfg["b_size"], cfg["sigma"])
        assert out.shape == x.shape and out.dtype == x.dtype
        assert jnp.allclose(out, ref, rtol=1e-5, atol=1e-5), f"mismatch for {cfg}"

    # Channels-last (lane-dense) path: C maps to lanes when C >= 128 and W < 128.
    x2 = jax.random.normal(jax.random.PRNGKey(0), (2, 128, 8, 8), dtype=jnp.float32)
    for cfg in [dict(b_type="linf", b_size=(3, 3), sigma=1.0),
                dict(b_type="l2",   b_size=(3, 3), sigma=0.5)]:
        out = jax.block_until_ready(divisive_normalization_2d(x2, **cfg))
        ref = _reference(x2, cfg["b_type"], cfg["b_size"], cfg["sigma"])
        assert jnp.allclose(out, ref, rtol=1e-5, atol=1e-5), f"mismatch NHWC {cfg}"

    print("KERNEL_OK")
</pallas_src>

<mosaic_0001>
module attributes {stable_mosaic.version = 11 : i64} {
  func.func @_dn_kernel(%arg0: i32, %arg1: memref<1x4x16x16xf32, #tpu.memory_space<vmem>>, %arg2: memref<1x4x16x16xf32, #tpu.memory_space<vmem>>, %arg3: memref<1x4x16x18xf32, #tpu.memory_space<vmem>>, %arg4: memref<1x4x18x16xf32, #tpu.memory_space<vmem>>) attributes {dimension_semantics = [#tpu.dimension_semantics<parallel>], iteration_bounds = array<i64: 2>, scalar_prefetch = 0 : i64, scratch_operands = 2 : i64, tpu.core_type = #tpu.core_type<tc>, window_params = [{transform_indices = @transform_0, window_bounds = array<i64: 1, 4, 16, 16>}, {transform_indices = @transform_1, window_bounds = array<i64: 1, 4, 16, 16>}]} {
    %c0 = arith.constant 0 : index
    %c0_0 = arith.constant 0 : index
    %c0_1 = arith.constant 0 : index
    %c0_2 = arith.constant 0 : index
    %0 = vector.load %arg1[%c0, %c0_0, %c0_1, %c0_2] : memref<1x4x16x16xf32, #tpu.memory_space<vmem>>, vector<1x4x16x16xf32>
    %1 = math.absf %0 : vector<1x4x16x16xf32>
    %cst = arith.constant 0.000000e+00 : f32
    %2 = vector.broadcast %cst : f32 to vector<1x4x16x1xf32>
    %c0_3 = arith.constant 0 : index
    %c0_4 = arith.constant 0 : index
    %c0_5 = arith.constant 0 : index
    %c0_6 = arith.constant 0 : index
    %3 = vector.load %arg3[%c0_3, %c0_4, %c0_5, %c0_6] : memref<1x4x16x18xf32, #tpu.memory_space<vmem>>, vector<1x4x16x1xf32>
    tpu.vector_store %arg3[%c0_3, %c0_4, %c0_5, %c0_6], %2 {strides = array<i32>} : memref<1x4x16x18xf32, #tpu.memory_space<vmem>>, vector<1x4x16x1xf32>,
    %c0_7 = arith.constant 0 : index
    %c0_8 = arith.constant 0 : index
    %c0_9 = arith.constant 0 : index
    %c17 = arith.constant 17 : index
    %4 = vector.load %arg3[%c0_7, %c0_8, %c0_9, %c17] : memref<1x4x16x18xf32, #tpu.memory_space<vmem>>, vector<1x4x16x1xf32>
    tpu.vector_store %arg3[%c0_7, %c0_8, %c0_9, %c17], %2 {strides = array<i32>} : memref<1x4x16x18xf32, #tpu.memory_space<vmem>>, vector<1x4x16x1xf32>,
    %c0_10 = arith.constant 0 : index
    %c0_11 = arith.constant 0 : index
    %c0_12 = arith.constant 0 : index
    %c1 = arith.constant 1 : index
    %5 = vector.load %arg3[%c0_10, %c0_11, %c0_12, %c1] : memref<1x4x16x18xf32, #tpu.memory_space<vmem>>, vector<1x4x16x16xf32>
    tpu.vector_store %arg3[%c0_10, %c0_11, %c0_12, %c1], %1 {strides = array<i32>} : memref<1x4x16x18xf32, #tpu.memory_space<vmem>>, vector<1x4x16x16xf32>,
    %c0_13 = arith.constant 0 : index
    %c0_14 = arith.constant 0 : index
    %c0_15 = arith.constant 0 : index
    %c0_16 = arith.constant 0 : index
    %6 = vector.load %arg3[%c0_13, %c0_14, %c0_15, %c0_16] : memref<1x4x16x18xf32, #tpu.memory_space<vmem>>, vector<1x4x16x16xf32>
    %7 = arith.maximumf %1, %6 : vector<1x4x16x16xf32>
    %c0_17 = arith.constant 0 : index
    %c0_18 = arith.constant 0 : index
    %c0_19 = arith.constant 0 : index
    %c2 = arith.constant 2 : index
    %8 = vector.load %arg3[%c0_17, %c0_18, %c0_19, %c2] : memref<1x4x16x18xf32, #tpu.memory_space<vmem>>, vector<1x4x16x16xf32>
    %9 = arith.maximumf %7, %8 : vector<1x4x16x16xf32>
    %cst_20 = arith.constant 0.000000e+00 : f32
    %10 = vector.broadcast %cst_20 : f32 to vector<1x4x1x16xf32>
    %c0_21 = arith.constant 0 : index
    %c0_22 = arith.constant 0 : index
    %c0_23 = arith.constant 0 : index
    %c0_24 = arith.constant 0 : index
    %11 = vector.load %arg4[%c0_21, %c0_22, %c0_23, %c0_24] : memref<1x4x18x16xf32, #tpu.memory_space<vmem>>, vector<1x4x1x16xf32>
    tpu.vector_store %arg4[%c0_21, %c0_22, %c0_23, %c0_24], %10 {strides = array<i32>} : memref<1x4x18x16xf32, #tpu.memory_space<vmem>>, vector<1x4x1x16xf32>,
    %c0_25 = arith.constant 0 : index
    %c0_26 = arith.constant 0 : index
    %c17_27 = arith.constant 17 : index
    %c0_28 = arith.constant 0 : index
    %12 = vector.load %arg4[%c0_25, %c0_26, %c17_27, %c0_28] : memref<1x4x18x16xf32, #tpu.memory_space<vmem>>, vector<1x4x1x16xf32>
    tpu.vector_store %arg4[%c0_25, %c0_26, %c17_27, %c0_28], %10 {strides = array<i32>} : memref<1x4x18x16xf32, #tpu.memory_space<vmem>>, vector<1x4x1x16xf32>,
    %c0_29 = arith.constant 0 : index
    %c0_30 = arith.constant 0 : index
    %c1_31 = arith.constant 1 : index
    %c0_32 = arith.constant 0 : index
    %13 = vector.load %arg4[%c0_29, %c0_30, %c1_31, %c0_32] : memref<1x4x18x16xf32, #tpu.memory_space<vmem>>, vector<1x4x16x16xf32>
    tpu.vector_store %arg4[%c0_29, %c0_30, %c1_31, %c0_32], %9 {strides = array<i32>} : memref<1x4x18x16xf32, #tpu.memory_space<vmem>>, vector<1x4x16x16xf32>,
    %c0_33 = arith.constant 0 : index
    %c0_34 = arith.constant 0 : index
    %c0_35 = arith.constant 0 : index
    %c0_36 = arith.constant 0 : index
    %14 = vector.load %arg4[%c0_33, %c0_34, %c0_35, %c0_36] : memref<1x4x18x16xf32, #tpu.memory_space<vmem>>, vector<1x4x16x16xf32>
    %15 = arith.maximumf %9, %14 : vector<1x4x16x16xf32>
    %c0_37 = arith.constant 0 : index
    %c0_38 = arith.constant 0 : index
    %c2_39 = arith.constant 2 : index
    %c0_40 = arith.constant 0 : index
    %16 = vector.load %arg4[%c0_37, %c0_38, %c2_39, %c0_40] : memref<1x4x18x16xf32, #tpu.memory_space<vmem>>, vector<1x4x16x16xf32>
    %17 = arith.maximumf %15, %16 : vector<1x4x16x16xf32>
    %cst_41 = arith.constant dense<0.000000e+00> : vector<1x16x16xf32>
    %18 = vector.multi_reduction <add>, %17, %cst_41 [1] : vector<1x4x16x16xf32> to vector<1x16x16xf32>
    %19 = vector.shape_cast %18 : vector<1x16x16xf32> to vector<1x1x16x16xf32>
    %cst_42 = arith.constant 4.000000e+00 : f32
    %20 = vector.broadcast %cst_42 : f32 to vector<1x1x16x16xf32>
    %21 = arith.divf %19, %20 : vector<1x1x16x16xf32>
    %cst_43 = arith.constant dense<0xFF800000> : vector<1x1x16xf32>
    %22 = vector.multi_reduction <maximumf>, %21, %cst_43 [3] : vector<1x1x16x16xf32> to vector<1x1x16xf32>
    %23 = vector.shape_cast %22 : vector<1x1x16xf32> to vector<1x1x16x1xf32>
    %cst_44 = arith.constant dense<0xFF800000> : vector<1x1x1xf32>
    %24 = vector.multi_reduction <maximumf>, %23, %cst_44 [2] : vector<1x1x16x1xf32> to vector<1x1x1xf32>
    %25 = vector.shape_cast %24 : vector<1x1x1xf32> to vector<1x1x1x1xf32>
    %cst_45 = arith.constant 1.000000e-07 : f32
    %26 = vector.broadcast %cst_45 : f32 to vector<1x1x1x1xf32>
    %27 = arith.addf %25, %26 : vector<1x1x1x1xf32>
    %cst_46 = arith.constant 1.000000e+00 : f32
    %28 = vector.broadcast %cst_46 : f32 to vector<1x1x1x1xf32>
    %29 = arith.divf %28, %27 : vector<1x1x1x1xf32>
    %c0_47 = arith.constant 0 : index
    %c0_48 = arith.constant 0 : index
    %c0_49 = arith.constant 0 : index
    %c0_50 = arith.constant 0 : index
    %30 = vector.load %arg1[%c0_47, %c0_48, %c0_49, %c0_50] : memref<1x4x16x16xf32, #tpu.memory_space<vmem>>, vector<1x4x16x16xf32>
    %31 = vector.broadcast %29 : vector<1x1x1x1xf32> to vector<1x4x16x16xf32>
    %32 = arith.mulf %30, %31 : vector<1x4x16x16xf32>
    %c0_51 = arith.constant 0 : index
    %c0_52 = arith.constant 0 : index
    %c0_53 = arith.constant 0 : index
    %c0_54 = arith.constant 0 : index
    %33 = vector.load %arg2[%c0_51, %c0_52, %c0_53, %c0_54] : memref<1x4x16x16xf32, #tpu.memory_space<vmem>>, vector<1x4x16x16xf32>
    tpu.vector_store %arg2[%c0_51, %c0_52, %c0_53, %c0_54], %32 {strides = array<i32>} : memref<1x4x16x16xf32, #tpu.memory_space<vmem>>, vector<1x4x16x16xf32>,
    return
  }
  func.func @transform_0(%arg0: i32) -> (i32, i32, i32, i32) {
    %c0_i32 = arith.constant 0 : i32
    %c0_i32_0 = arith.constant 0 : i32
    %c0_i32_1 = arith.constant 0 : i32
    %c0_i32_2 = arith.constant 0 : i32
    return %arg0, %c0_i32, %c0_i32_0, %c0_i32_1 : i32, i32, i32, i32
  }
  func.func @transform_1(%arg0: i32) -> (i32, i32, i32, i32) {
    %c0_i32 = arith.constant 0 : i32
    %c0_i32_0 = arith.constant 0 : i32
    %c0_i32_1 = arith.constant 0 : i32
    %c0_i32_2 = arith.constant 0 : i32
    return %arg0, %c0_i32, %c0_i32_0, %c0_i32_1 : i32, i32, i32, i32
  }
}

</mosaic_0001>

<llo_original>
// kernel: tpu_custom_call.1
$region0: #{tpu_custom_call.1}
  #allocation0 [shape = 'u32[]', space=smem, size = 0x4, offset = 0x4, fixed_abs, tag = 'smem constant byte address 0x4 - core index']
  #allocation1 [shape = 'u32[144,128]{1,0:T(1,128)}', space=vmem, size = 0x12000, scoped, tag = 'internal scratch']
  #allocation2 [shape = 'f32[1,4,16,18]{3,2,1,0:T(8,128)}', space=vmem, size = 0x8000, scoped, tag = 'scratch operand']
  #allocation3 [shape = 'f32[1,4,18,16]{3,2,1,0:T(8,128)}', space=vmem, size = 0xc000, scoped, tag = 'scratch operand']
  %s0 = inlined_call_operand.hbm [shape: f32[2,4,16,16], index: 0, kind: input, shape index: {}]
  %s1 = inlined_call_operand.hbm [shape: f32[2,4,16,16], index: 1, kind: output, shape index: {}]
  %s2 = sld [smem:[#allocation0]]
  $region41: #{tpu_custom_call.1} parent=0
    _
  %s4 = ssub.s32 1, %s2
  %s5 = scalar_select 0, %s4, %s2
  $region1: #{tpu_custom_call.1} parent=0
    #allocation4 [shape = 'u8[65536]{0}', space=vmem, size = 0x10000, scoped, tag = 'input window, operand 0']
    #allocation5 [shape = 's32[2]{0}', space=sflag, size = 0x8, scoped, tag = 'scoped memory for tpu_custom_call.1']
    #allocation6 [shape = 's32[2]{0}', space=sflag, size = 0x8, scoped, tag = 'scoped memory for tpu_custom_call.1']
    #allocation7 [shape = 'u8[65536]{0}', space=vmem, size = 0x10000, scoped, tag = 'output window, operand 0']
    %6 = vsyncpa [#allocation5], 0
    %s7 = scalar_lea.sflag [#allocation5], 1
    %8 = vsyncpa %s7, 0
    %9 = vsyncpa [#allocation6], 0
    %s10 = scalar_lea.sflag [#allocation6], 1
    %11 = vsyncpa %s10, 0
    loop: start=0, step=1, limit=4
    $region2: #{tpu_custom_call.1} parent=1 // loop_pre_header
      _
    $region3: #{tpu_custom_call.1} parent=1 // loop_header
      %s13 = sphi 0, %s17
      %p14 = scmp.ge.s32.totalorder %s13, 4
      %s23 = sphi 0, %s25
      %s26 = sphi 0, %s23
      %s27 = sphi 0, %s26
      %s43 = sphi 0, %s27
      %s49 = sphi 0, %s51
      %s52 = sphi 0, %s49
      %s53 = sphi 0, %s52
      %s69 = sphi 0, %s53
    $region4: #{tpu_custom_call.1} parent=1 // loop_header_branch
      %16 = sbr.rel (%p14) target = $region8
    $region5: #{tpu_custom_call.1} parent=1 // loop_body
      %s18 = ssub.s32 %s13, 1
      %s19 = ssub.s32 %s13, 2
      %s20 = sadd.s32 %s13, 1
      %s21 = ssub.s32 %s13, %s20
      %p22 = scmp.eq.s32.totalorder %s21, 0
      %s24 = sadd.s32 %s23, 1
      %s25 = scalar_select %p22, %s23, %s24
      %p28 = pneg %p22
      %p29 = scmp.eq.s32.totalorder %s13, 1
      %p30 = por %p28, %p29
      %p31 = scmp.ne.s32.totalorder %s23, %s26
      %p32 = scmp.eq.s32.totalorder %s13, 0
      %p33 = por %p31, %p32
      %p34 = scmp.ne.s32.totalorder %s23, %s26
      %p35 = scmp.eq.s32.totalorder %s18, 1
      %p36 = por %p34, %p35
      %p37 = scmp.ne.s32.totalorder %s26, %s27
      %p38 = scmp.eq.s32.totalorder %s18, 0
      %p39 = por %p37, %p38
      %p40 = scmp.ne.s32.totalorder %s26, %s27
      %p41 = scmp.eq.s32.totalorder %s19, 1
      %p42 = por %p40, %p41
      %p44 = scmp.ne.s32.totalorder %s27, %s43
      %p45 = scmp.eq.s32.totalorder %s19, 0
      %p46 = por %p44, %p45
      %s47 = ssub.s32 %s13, %s20
      %p48 = scmp.eq.s32.totalorder %s47, 0
      %s50 = sadd.s32 %s49, 1
      %s51 = scalar_select %p48, %s49, %s50
      %p54 = pneg %p48
      %p55 = scmp.eq.s32.totalorder %s13, 1
      %p56 = por %p54, %p55
      %p57 = scmp.ne.s32.totalorder %s49, %s52
      %p58 = scmp.eq.s32.totalorder %s13, 0
      %p59 = por %p57, %p58
      %p60 = scmp.ne.s32.totalorder %s49, %s52
      %p61 = scmp.eq.s32.totalorder %s18, 1
      %p62 = por %p60, %p61
      %p63 = scmp.ne.s32.totalorder %s52, %s53
      %p64 = scmp.eq.s32.totalorder %s18, 0
      %p65 = por %p63, %p64
      %p66 = scmp.ne.s32.totalorder %s52, %s53
      %p67 = scmp.eq.s32.totalorder %s19, 1
      %p68 = por %p66, %p67
      %p70 = scmp.ne.s32.totalorder %s53, %s69
      %p71 = scmp.eq.s32.totalorder %s19, 0
      %p72 = por %p70, %p71
      %p73 = scmp.le.s32.totalorder 1, %s13
      %p74 = scmp.lt.s32.totalorder %s13, 3
      %p75 = pnand %p73, %p74
      %p76 = pneg %p75
      // Predicated region
      $region9: #{tpu_custom_call.1} parent=5 // pred_check
        _
      $region10: #{tpu_custom_call.1} parent=5 // pred_check_branch
        %78 = sbr.rel (%p75) target = $region12
      $region11: #{tpu_custom_call.1} parent=5 // pred_region
        %s79 = ssub.s32 %s13, 1
      $region12: #{tpu_custom_call.1} parent=5 // pred_fallthru
        _
      %p80 = scmp.lt.s32.totalorder %s13, 2
      // Predicated region
      $region13: #{tpu_custom_call.1} parent=5 // pred_check
        %p81 = pneg %p80
      $region14: #{tpu_custom_call.1} parent=5 // pred_check_branch
        %83 = sbr.rel (%p81) target = $region16
      $region15: #{tpu_custom_call.1} parent=5 // pred_region
        // Predicated region
        $region17: #{tpu_custom_call.1} parent=15 // pred_check
          %p84 = pneg %p33
        $region18: #{tpu_custom_call.1} parent=15 // pred_check_branch
          %86 = sbr.rel (%p84) target = $region20
        $region19: #{tpu_custom_call.1} parent=15 // pred_region
          %s87 = sand.u32 %s23, 1
          %s88 = scalar_lea.sflag [#allocation5], %s87
          %s89 = sand.u32 %s23, 1
          %s90 = smul.addr %s89, 64
          %s91 = scalar_lea.vmem [#allocation4], %s90
          %s93 = ssub.s32 1024, 1024
          %94 = vsyncadd %s88, %s93
          %s95 = smul.addr %s13, 8
          %s96 = smul.addr %s95, 128
          %s97 = scalar_lea.hbm %s0, %s96
          %s98 = sshll.u32 %s91, 4
          %s99 = int_to_ptr.vmem [resolvable:$true] %s98
          %104 = dma.hbm_to_vmem [thread:$0]  %s97, 1024, %s99, %s88, 128, 128, 8
        $region20: #{tpu_custom_call.1} parent=15 // pred_fallthru
          _
      $region16: #{tpu_custom_call.1} parent=5 // pred_fallthru
        _
      %p105 = scmp.le.s32.totalorder 1, %s13
      %p106 = scmp.lt.s32.totalorder %s13, 3
      %p107 = pnand %p105, %p106
      %p108 = pneg %p107
      // Predicated region
      $region21: #{tpu_custom_call.1} parent=5 // pred_check
        _
      $region22: #{tpu_custom_call.1} parent=5 // pred_check_branch
        %110 = sbr.rel (%p107) target = $region24
      $region23: #{tpu_custom_call.1} parent=5 // pred_region
        %s111 = ssub.s32 %s13, 1
        %s112 = sand.u32 %s26, 1
        %s113 = scalar_lea.sflag [#allocation5], %s112
        %s114 = sand.u32 %s26, 1
        %s115 = smul.addr %s114, 64
        %s116 = scalar_lea.vmem [#allocation4], %s115
        // Predicated region
        $region25: #{tpu_custom_call.1} parent=23 // pred_check
          %p117 = pneg %p39
        $region26: #{tpu_custom_call.1} parent=23 // pred_check_branch
          %119 = sbr.rel (%p117) target = $region28
        $region27: #{tpu_custom_call.1} parent=23 // pred_region
          %120 = dma.done %s113, 1024
        $region28: #{tpu_custom_call.1} parent=23 // pred_fallthru
          _
        %s121 = sand.u32 %s26, 1
        %s122 = scalar_lea.sflag [#allocation5], %s121
        %s123 = sand.u32 %s26, 1
        %s124 = smul.addr %s123, 64
        %s125 = scalar_lea.vmem [#allocation4], %s124
        %p126 = pneg %p39
        %p127 = pneg %p36
        %p128 = pneg %p65
        %p129 = pneg %p62
        %s130 = sand.u32 %s52, 1
        %s131 = scalar_lea.sflag [#allocation6], %s130
        %s132 = sand.u32 %s52, 1
        %s133 = smul.addr %s132, 64
        %s134 = scalar_lea.vmem [#allocation7], %s133
        %v135 = vld [vmem:[%s116] sm:$0xff]
        %v136 = vld [vmem:[%s116 + $0x8] sm:$0xff]
        %v137 = vld [vmem:[%s116 + $0x10] sm:$0xff]
        %v138 = vld [vmem:[%s116 + $0x18] sm:$0xff]
        %v139 = vld [vmem:[%s116 + $0x20] sm:$0xff]
        %v140 = vld [vmem:[%s116 + $0x28] sm:$0xff]
        %v141 = vld [vmem:[%s116 + $0x30] sm:$0xff]
        %v142 = vld [vmem:[%s116 + $0x38] sm:$0xff]
        %v143 = vand.u32 2147483647, %v135
        %v144 = vand.u32 2147483647, %v136
        %v145 = vand.u32 2147483647, %v137
        %v146 = vand.u32 2147483647, %v138
        %v147 = vand.u32 2147483647, %v139
        %v148 = vand.u32 2147483647, %v140
        %v149 = vand.u32 2147483647, %v141
        %v150 = vand.u32 2147483647, %v142
        %vm151 = vcmask 7168
        %152 = vst.msk [vmem:[#allocation2] sm:$0xff] %vm151, 0.0
        %153 = vst.msk [vmem:[#allocation2 + $0x8] sm:$0xff] %vm151, 0.0
        %154 = vst.msk [vmem:[#allocation2 + $0x10] sm:$0xff] %vm151, 0.0
        %155 = vst.msk [vmem:[#allocation2 + $0x18] sm:$0xff] %vm151, 0.0
        %156 = vst.msk [vmem:[#allocation2 + $0x20] sm:$0xff] %vm151, 0.0
        %157 = vst.msk [vmem:[#allocation2 + $0x28] sm:$0xff] %vm151, 0.0
        %158 = vst.msk [vmem:[#allocation2 + $0x30] sm:$0xff] %vm151, 0.0
        %159 = vst.msk [vmem:[#allocation2 + $0x38] sm:$0xff] %vm151, 0.0
        %vm160 = vcmask 146568
        %161 = vst.msk [vmem:[#allocation2] sm:$0xff] %vm160, 0.0
        %162 = vst.msk [vmem:[#allocation2 + $0x8] sm:$0xff] %vm160, 0.0
        %163 = vst.msk [vmem:[#allocation2 + $0x10] sm:$0xff] %vm160, 0.0
        %164 = vst.msk [vmem:[#allocation2 + $0x18] sm:$0xff] %vm160, 0.0
        %165 = vst.msk [vmem:[#allocation2 + $0x20] sm:$0xff] %vm160, 0.0
        %166 = vst.msk [vmem:[#allocation2 + $0x28] sm:$0xff] %vm160, 0.0
        %167 = vst.msk [vmem:[#allocation2 + $0x30] sm:$0xff] %vm160, 0.0
        %168 = vst.msk [vmem:[#allocation2 + $0x38] sm:$0xff] %vm160, 0.0
        %177 = vrot.lane.b32.xlu0 %v143, 1
        %v178 = vpop.permute.xlu0 %177
        %179 = vrot.lane.b32.xlu0 %v144, 1
        %v180 = vpop.permute.xlu0 %179
        %181 = vrot.lane.b32.xlu0 %v145, 1
        %v182 = vpop.permute.xlu0 %181
        %183 = vrot.lane.b32.xlu0 %v146, 1
        %v184 = vpop.permute.xlu0 %183
        %185 = vrot.lane.b32.xlu0 %v147, 1
        %v186 = vpop.permute.xlu0 %185
        %187 = vrot.lane.b32.xlu0 %v148, 1
        %v188 = vpop.permute.xlu0 %187
        %189 = vrot.lane.b32.xlu0 %v149, 1
        %v190 = vpop.permute.xlu0 %189
        %191 = vrot.lane.b32.xlu0 %v150, 1
        %v192 = vpop.permute.xlu0 %191
        %vm201 = vcmask 138248
        %202 = vst.msk [vmem:[#allocation2] sm:$0xff] %vm201, %v178
        %203 = vst.msk [vmem:[#allocation2 + $0x8] sm:$0xff] %vm201, %v180
        %204 = vst.msk [vmem:[#allocation2 + $0x10] sm:$0xff] %vm201, %v182
        %205 = vst.msk [vmem:[#allocation2 + $0x18] sm:$0xff] %vm201, %v184
        %206 = vst.msk [vmem:[#allocation2 + $0x20] sm:$0xff] %vm201, %v186
        %207 = vst.msk [vmem:[#allocation2 + $0x28] sm:$0xff] %vm201, %v188
        %208 = vst.msk [vmem:[#allocation2 + $0x30] sm:$0xff] %vm201, %v190
        %209 = vst.msk [vmem:[#allocation2 + $0x38] sm:$0xff] %vm201, %v192
        %v210 = vld [vmem:[#allocation2] sm:$0xff]
        %v211 = vld [vmem:[#allocation2 + $0x8] sm:$0xff]
        %v212 = vld [vmem:[#allocation2 + $0x10] sm:$0xff]
        %v213 = vld [vmem:[#allocation2 + $0x18] sm:$0xff]
        %v214 = vld [vmem:[#allocation2 + $0x20] sm:$0xff]
        %v215 = vld [vmem:[#allocation2 + $0x28] sm:$0xff]
        %v216 = vld [vmem:[#allocation2 + $0x30] sm:$0xff]
        %v217 = vld [vmem:[#allocation2 + $0x38] sm:$0xff]
        %v218 = vmax.f32 %v143, %v210
        %v219 = vmax.f32 %v144, %v211
        %v220 = vmax.f32 %v145, %v212
        %v221 = vmax.f32 %v146, %v213
        %v222 = vmax.f32 %v147, %v214
        %v223 = vmax.f32 %v148, %v215
        %v224 = vmax.f32 %v149, %v216
        %v225 = vmax.f32 %v150, %v217
        %234 = vrot.lane.b32.xlu0 %v210, 126
        %v235 = vpop.permute.xlu0 %234
        %236 = vrot.lane.b32.xlu0 %v211, 126
        %v237 = vpop.permute.xlu0 %236
        %238 = vrot.lane.b32.xlu0 %v212, 126
        %v239 = vpop.permute.xlu0 %238
        %240 = vrot.lane.b32.xlu0 %v213, 126
        %v241 = vpop.permute.xlu0 %240
        %242 = vrot.lane.b32.xlu0 %v214, 126
        %v243 = vpop.permute.xlu0 %242
        %244 = vrot.lane.b32.xlu0 %v215, 126
        %v245 = vpop.permute.xlu0 %244
        %246 = vrot.lane.b32.xlu0 %v216, 126
        %v247 = vpop.permute.xlu0 %246
        %248 = vrot.lane.b32.xlu0 %v217, 126
        %v249 = vpop.permute.xlu0 %248
        %v258 = vmax.f32 %v218, %v235
        %v259 = vmax.f32 %v219, %v237
        %v260 = vmax.f32 %v220, %v239
        %v261 = vmax.f32 %v221, %v241
        %v262 = vmax.f32 %v222, %v243
        %v263 = vmax.f32 %v223, %v245
        %v264 = vmax.f32 %v224, %v247
        %v265 = vmax.f32 %v225, %v249
        %vm266 = vcmask 122880
        %267 = vst.msk [vmem:[#allocation3] sm:$0x1] %vm266, 0.0
        %268 = vst.msk [vmem:[#allocation3 + $0x18] sm:$0x1] %vm266, 0.0
        %269 = vst.msk [vmem:[#allocation3 + $0x30] sm:$0x1] %vm266, 0.0
        %270 = vst.msk [vmem:[#allocation3 + $0x48] sm:$0x1] %vm266, 0.0
        %271 = vst.msk [vmem:[#allocation3 + $0x11] sm:$0x1] %vm266, 0.0
        %272 = vst.msk [vmem:[#allocation3 + $0x29] sm:$0x1] %vm266, 0.0
        %273 = vst.msk [vmem:[#allocation3 + $0x41] sm:$0x1] %vm266, 0.0
        %274 = vst.msk [vmem:[#allocation3 + $0x59] sm:$0x1] %vm266, 0.0
        %vm275 = vcmask 130048
        %276 = vst.msk [vmem:[#allocation3 + $0x1] sm:$0xff] %vm275, %v258
        %277 = vst.msk [vmem:[#allocation3 + $0x9] sm:$0xff] %vm275, %v259
        %278 = vst.msk [vmem:[#allocation3 + $0x19] sm:$0xff] %vm275, %v260
        %279 = vst.msk [vmem:[#allocation3 + $0x21] sm:$0xff] %vm275, %v261
        %280 = vst.msk [vmem:[#allocation3 + $0x31] sm:$0xff] %vm275, %v262
        %281 = vst.msk [vmem:[#allocation3 + $0x39] sm:$0xff] %vm275, %v263
        %282 = vst.msk [vmem:[#allocation3 + $0x49] sm:$0xff] %vm275, %v264
        %283 = vst.msk [vmem:[#allocation3 + $0x51] sm:$0xff] %vm275, %v265
        %v284 = vld [vmem:[#allocation3] sm:$0xff]
        %v285 = vld [vmem:[#allocation3 + $0x8] sm:$0xff]
        %v286 = vld [vmem:[#allocation3 + $0x18] sm:$0xff]
        %v287 = vld [vmem:[#allocation3 + $0x20] sm:$0xff]
        %v288 = vld [vmem:[#allocation3 + $0x30] sm:$0xff]
        %v289 = vld [vmem:[#allocation3 + $0x38] sm:$0xff]
        %v290 = vld [vmem:[#allocation3 + $0x48] sm:$0xff]
        %v291 = vld [vmem:[#allocation3 + $0x50] sm:$0xff]
        %v292 = vmax.f32 %v258, %v284
        %v293 = vmax.f32 %v259, %v285
        %v294 = vmax.f32 %v260, %v286
        %v295 = vmax.f32 %v261, %v287
        %v296 = vmax.f32 %v262, %v288
        %v297 = vmax.f32 %v263, %v289
        %v298 = vmax.f32 %v264, %v290
        %v299 = vmax.f32 %v265, %v291
        %v300 = vld [vmem:[#allocation3 + $0x2] sm:$0xff]
        %v301 = vld [vmem:[#allocation3 + $0xa] sm:$0xff]
        %v302 = vld [vmem:[#allocation3 + $0x1a] sm:$0xff]
        %v303 = vld [vmem:[#allocation3 + $0x22] sm:$0xff]
        %v304 = vld [vmem:[#allocation3 + $0x32] sm:$0xff]
        %v305 = vld [vmem:[#allocation3 + $0x3a] sm:$0xff]
        %v306 = vld [vmem:[#allocation3 + $0x4a] sm:$0xff]
        %v307 = vld [vmem:[#allocation3 + $0x52] sm:$0xff]
        %v308 = vmax.f32 %v292, %v300
        %v309 = vmax.f32 %v293, %v301
        %v310 = vmax.f32 %v294, %v302
        %v311 = vmax.f32 %v295, %v303
        %v312 = vmax.f32 %v296, %v304
        %v313 = vmax.f32 %v297, %v305
        %v314 = vmax.f32 %v298, %v306
        %v315 = vmax.f32 %v299, %v307
        %v316 = vsel %vm275, %v308, 0.0
        %v317 = vsel %vm275, %v310, 0.0
        %v318 = vadd.f32 %v316, %v317
        %v319 = vsel %vm275, %v312, 0.0
        %v320 = vadd.f32 %v318, %v319
        %v321 = vsel %vm275, %v314, 0.0
        %v322 = vadd.f32 %v320, %v321
        %v323 = vsel %vm275, %v309, 0.0
        %v324 = vsel %vm275, %v311, 0.0
        %v325 = vadd.f32 %v323, %v324
        %v326 = vsel %vm275, %v313, 0.0
        %v327 = vadd.f32 %v325, %v326
        %v328 = vsel %vm275, %v315, 0.0
        %v329 = vadd.f32 %v327, %v328
        %v330 = vrcp.pop 4.0
        %v331 = vmul.f32 %v322, %v330
        %v332 = vmul.f32 %v329, %v330
        %v333 = vsel %vm275, %v331, -inf
        %334 = vmax.xlane.f32.xlu0 %v333
        %v335 = vpop.xlane.xlu0 %334
        %v336 = vsel %vm275, %v332, -inf
        %337 = vmax.xlane.f32.xlu0 %v336
        %v338 = vpop.xlane.xlu0 %337
        %v339 = vmax.f32 %v335, %v338
        %v340 = vrot.slane %v339, 4
        %v341 = vmax.f32 %v339, %v340
        %v342 = vrot.slane %v341, 2
        %v343 = vmax.f32 %v341, %v342
        %v344 = vrot.slane %v343, 1
        %v345 = vmax.f32 %v343, %v344
        %v346 = vadd.f32 %v345, 1e-07
        %v347 = vrcp.pop %v346
        %v348 = vmul.f32 1.0, %v347
        %v349 = vld [vmem:[%s116] sm:$0xff]
        %v350 = vld [vmem:[%s116 + $0x8] sm:$0xff]
        %v351 = vld [vmem:[%s116 + $0x10] sm:$0xff]
        %v352 = vld [vmem:[%s116 + $0x18] sm:$0xff]
        %v353 = vld [vmem:[%s116 + $0x20] sm:$0xff]
        %v354 = vld [vmem:[%s116 + $0x28] sm:$0xff]
        %v355 = vld [vmem:[%s116 + $0x30] sm:$0xff]
        %v356 = vld [vmem:[%s116 + $0x38] sm:$0xff]
        %v357 = vmul.f32 %v349, %v348
        %v358 = vmul.f32 %v350, %v348
        %v359 = vmul.f32 %v351, %v348
        %v360 = vmul.f32 %v352, %v348
        %v361 = vmul.f32 %v353, %v348
        %v362 = vmul.f32 %v354, %v348
        %v363 = vmul.f32 %v355, %v348
        %v364 = vmul.f32 %v356, %v348
        %365 = vst.msk [vmem:[%s134] sm:$0xff] %vm275, %v357
        %366 = vst.msk [vmem:[%s134 + $0x8] sm:$0xff] %vm275, %v358
        %367 = vst.msk [vmem:[%s134 + $0x10] sm:$0xff] %vm275, %v359
        %368 = vst.msk [vmem:[%s134 + $0x18] sm:$0xff] %vm275, %v360
        %369 = vst.msk [vmem:[%s134 + $0x20] sm:$0xff] %vm275, %v361
        %370 = vst.msk [vmem:[%s134 + $0x28] sm:$0xff] %vm275, %v362
        %371 = vst.msk [vmem:[%s134 + $0x30] sm:$0xff] %vm275, %v363
        %372 = vst.msk [vmem:[%s134 + $0x38] sm:$0xff] %vm275, %v364
        %s373 = sand.u32 %s52, 1
        %s374 = scalar_lea.sflag [#allocation6], %s373
        %s375 = sand.u32 %s52, 1
        %s376 = smul.addr %s375, 64
        %s377 = scalar_lea.vmem [#allocation7], %s376
        // Predicated region
        $region29: #{tpu_custom_call.1} parent=23 // pred_check
          %p378 = pneg %p62
        $region30: #{tpu_custom_call.1} parent=23 // pred_check_branch
          %380 = sbr.rel (%p378) target = $region32
        $region31: #{tpu_custom_call.1} parent=23 // pred_region
          %s382 = ssub.s32 1024, 1024
          %383 = vsyncadd %s374, %s382
          %s384 = smul.addr %s18, 8
          %s385 = smul.addr %s384, 128
          %s386 = scalar_lea.hbm %s1, %s385
          %s387 = sshll.u32 %s377, 4
          %s388 = int_to_ptr.vmem [resolvable:$true] %s387
          %393 = dma.vmem_to_hbm [thread:$0]  %s388, 1024, %s386, %s374, 128, 128, 8
        $region32: #{tpu_custom_call.1} parent=23 // pred_fallthru
          _
      $region24: #{tpu_custom_call.1} parent=5 // pred_fallthru
        _
      %p394 = scmp.le.s32.totalorder 2, %s13
      // Predicated region
      $region33: #{tpu_custom_call.1} parent=5 // pred_check
        %p395 = pneg %p394
      $region34: #{tpu_custom_call.1} parent=5 // pred_check_branch
        %397 = sbr.rel (%p395) target = $region36
      $region35: #{tpu_custom_call.1} parent=5 // pred_region
        %s398 = ssub.s32 %s13, 2
        // Predicated region
        $region37: #{tpu_custom_call.1} parent=35 // pred_check
          %p399 = pneg %p68
        $region38: #{tpu_custom_call.1} parent=35 // pred_check_branch
          %401 = sbr.rel (%p399) target = $region40
        $region39: #{tpu_custom_call.1} parent=35 // pred_region
          %s402 = sand.u32 %s53, 1
          %s403 = scalar_lea.sflag [#allocation6], %s402
          %s404 = sand.u32 %s53, 1
          %s405 = smul.addr %s404, 64
          %s406 = scalar_lea.vmem [#allocation7], %s405
          %407 = dma.done %s403, 1024
        $region40: #{tpu_custom_call.1} parent=35 // pred_fallthru
          _
      $region36: #{tpu_custom_call.1} parent=5 // pred_fallthru
        _
    $region6: #{tpu_custom_call.1} parent=1 // loop_footer
      %s17 = sadd.s32 1, %s13
    $region7: #{tpu_custom_call.1} parent=1 // loop_footer_branch
      %12 = sbr.rel target = $region3
    $region8: #{tpu_custom_call.1} parent=1 // loop_exit
      _
    %408 = vsyncpa [#allocation5], 1
    %s409 = scalar_lea.sflag [#allocation5], 1
    %410 = vsyncpa %s409, 1
    %411 = vsyncpa [#allocation6], 1
    %s412 = scalar_lea.sflag [#allocation6], 1
    %413 = vsyncpa %s412, 1

</llo_original>
